<compile_context>
chip_gen: v7x
topology: tpu7x:2x2x1
jax: 0.10.0
libtpu: 0.0.40
codegen_flags: <defaults>
</compile_context>

<pallas_src>
import jax
import jax.numpy as jnp
import numpy as np
from jax.experimental import pallas as pl
from jax.experimental.pallas import tpu as pltpu


def _make_kernel(eps: float, vocab_size: int):
    inv_v = eps / float(vocab_size)
    keep = 1.0 - eps

    def kernel(logits_ref, targets_ref, out_ref):
        logits = logits_ref[...].astype(jnp.float32)    # (tile, V)
        tgt = targets_ref[...]                          # (tile, 1) int32, -1 => masked
        mask = (tgt >= 0).astype(jnp.float32)           # (tile, 1)

        # numerically-stable log-sum-exp over the vocab (lane) axis
        m = jnp.max(logits, axis=-1, keepdims=True)
        lse = m + jnp.log(jnp.sum(jnp.exp(logits - m), axis=-1, keepdims=True))

        # fused reduction:
        #   (1-eps)*logit[target] + (eps/V)*sum(logits)
        #     == sum_v (eps/V + (1-eps)*[v == target]) * logit[v]
        vocab_iota = jax.lax.broadcasted_iota(jnp.int32, logits.shape, 1)
        w = jnp.where(vocab_iota == tgt, keep + inv_v, inv_v)
        weighted = jnp.sum(w * logits, axis=-1, keepdims=True)

        per_tok = lse - weighted                        # (tile, 1)
        partial = jnp.sum(per_tok * mask)               # scalar partial sum

        # lane-dense, unmasked (1, 8, 128) store; wrapper reads [i, 0, 0].
        out_ref[...] = jnp.broadcast_to(partial, out_ref.shape).astype(out_ref.dtype)

    return kernel


def _auto_token_tile(n_tokens, vocab, itemsize,
                     logits_buffer_budget_bytes=24 * 1024 * 1024):
    """Largest token tile (multiple of 8) whose double-buffered logits blocks
    fit a portable VMEM budget (safe on v7x's 64 MiB as well as v5e/v6e)."""
    t = logits_buffer_budget_bytes // (2 * vocab * itemsize)
    t = max(8, (min(int(t), 1024) // 8) * 8)
    nt8 = ((n_tokens + 7) // 8) * 8          # never exceed the token count
    return int(min(t, nt8))


def label_smoothed_ce(predicted, targets, lengths, eps, *,
                      token_tile=None, vmem_limit_bytes=48 * 1024 * 1024):
    """predicted: (N, T, V) float (f32 or bf16, passed through untouched);
    targets: (N, T) int; lengths: (N, 1) int.
    Returns the masked-mean label-smoothed CE (matches the PyTorch module)."""
    N, T, V = predicted.shape
    NT = N * T
    itemsize = jnp.dtype(predicted.dtype).itemsize

    if token_tile is None:
        token_tile = _auto_token_tile(NT, V, itemsize)

    # Fold the valid-token mask (index < length) into the targets as -1 so the
    # kernel needs no separate mask stream.
    valid = jnp.arange(T, dtype=jnp.int32)[None, :] < lengths.astype(jnp.int32)
    tgt = jnp.where(valid, targets.astype(jnp.int32), -1).reshape(NT, 1)

    logits = predicted.reshape(NT, V)

    # Pad the token axis so the tile divides it exactly.  Padded rows have
    # tgt = -1 and finite (zero) logits, so they contribute exactly 0.
    nt_pad = ((NT + token_tile - 1) // token_tile) * token_tile
    if nt_pad != NT:
        logits = jnp.pad(logits, ((0, nt_pad - NT), (0, 0)))
        tgt = jnp.pad(tgt, ((0, nt_pad - NT), (0, 0)), constant_values=-1)

    grid = (nt_pad // token_tile,)

    # NOTE: the vocab axis is taken as a full-extent block; Mosaic handles a
    # ragged (non-multiple-of-128) last dim with masked lanes, which avoids an
    # extra whole-array pad copy in HBM for a memory-bound kernel.
    partials = pl.pallas_call(
        _make_kernel(float(eps), V),
        out_shape=jax.ShapeDtypeStruct((grid[0], 8, 128), jnp.float32),
        grid_spec=pltpu.PrefetchScalarGridSpec(
            num_scalar_prefetch=0,
            grid=grid,
            in_specs=[
                pl.BlockSpec((token_tile, V), lambda i: (i, 0)),
                pl.BlockSpec((token_tile, 1), lambda i: (i, 0)),
            ],
            out_specs=pl.BlockSpec((1, 8, 128), lambda i: (i, 0, 0)),
        ),
        compiler_params=pltpu.CompilerParams(
            dimension_semantics=("parallel",),
            vmem_limit_bytes=vmem_limit_bytes),
    )(logits, tgt)

    loss_sum = jnp.sum(partials[:, 0, 0])
    count = jnp.sum(lengths).astype(jnp.float32)   # number of valid tokens
    return (loss_sum / count).astype(jnp.float32)


def _reference(predicted, targets, lengths, eps):
    """Pure-JAX reference matching the PyTorch semantics (masked mean)."""
    N, T, V = predicted.shape
    mask = (jnp.arange(T)[None, :] < lengths).reshape(-1).astype(jnp.float32)
    logits = predicted.reshape(-1, V).astype(jnp.float32)
    tgt = targets.reshape(-1)
    one_hot = jax.nn.one_hot(tgt, V, dtype=jnp.float32)
    tv = one_hot * (1.0 - eps) + eps / V
    logp = jax.nn.log_softmax(logits, axis=1)
    per_tok = jnp.sum(-tv * logp, axis=1)
    return jnp.sum(per_tok * mask) / jnp.sum(mask)


if __name__ == "__main__":
    key = jax.random.PRNGKey(0)
    N, T, V = 2, 8, 32          # batch, n_predictions, vocab_size
    eps = 0.1

    k1, k2, k3 = jax.random.split(key, 3)
    predicted = jax.random.normal(k1, (N, T, V), dtype=jnp.float32)
    targets = jax.random.randint(k2, (N, T), 0, V, dtype=jnp.int32)
    lengths = jnp.array([[5], [7]], dtype=jnp.int32)

    loss = label_smoothed_ce(predicted, targets, lengths, eps)
    loss = jax.block_until_ready(loss)

    ref = _reference(predicted, targets, lengths, eps)
    assert np.allclose(np.asarray(loss), np.asarray(ref), rtol=1e-5, atol=1e-5)

    print("KERNEL_OK")
</pallas_src>

<mosaic_0001>
module attributes {stable_mosaic.version = 11 : i64} {
  func.func @kernel(%arg0: i32, %arg1: memref<16x32xf32, #tpu.memory_space<vmem>>, %arg2: memref<16x1xi32, #tpu.memory_space<vmem>>, %arg3: memref<1x8x128xf32, #tpu.memory_space<vmem>>) attributes {dimension_semantics = [#tpu.dimension_semantics<parallel>], iteration_bounds = array<i64: 1>, scalar_prefetch = 0 : i64, scratch_operands = 0 : i64, tpu.core_type = #tpu.core_type<tc>, window_params = [{transform_indices = @transform_0, window_bounds = array<i64: 16, 32>}, {transform_indices = @transform_1, window_bounds = array<i64: 16, 1>}, {transform_indices = @transform_2, window_bounds = array<i64: 1, 8, 128>}]} {
    %c0 = arith.constant 0 : index
    %c0_0 = arith.constant 0 : index
    %0 = vector.load %arg1[%c0, %c0_0] : memref<16x32xf32, #tpu.memory_space<vmem>>, vector<16x32xf32>
    %c0_1 = arith.constant 0 : index
    %c0_2 = arith.constant 0 : index
    %1 = vector.load %arg2[%c0_1, %c0_2] : memref<16x1xi32, #tpu.memory_space<vmem>>, vector<16x1xi32>
    %c0_i32 = arith.constant 0 : i32
    %2 = vector.broadcast %c0_i32 : i32 to vector<16x1xi32>
    %3 = arith.cmpi sge, %1, %2 : vector<16x1xi32>
    %4 = arith.extui %3 : vector<16x1xi1> to vector<16x1xi32>
    %5 = arith.sitofp %4 : vector<16x1xi32> to vector<16x1xf32>
    %cst = arith.constant dense<0xFF800000> : vector<16xf32>
    %6 = vector.multi_reduction <maximumf>, %0, %cst [1] : vector<16x32xf32> to vector<16xf32>
    %7 = vector.shape_cast %6 : vector<16xf32> to vector<16x1xf32>
    %8 = vector.broadcast %7 : vector<16x1xf32> to vector<16x32xf32>
    %9 = arith.subf %0, %8 : vector<16x32xf32>
    %10 = math.exp %9 : vector<16x32xf32>
    %cst_3 = arith.constant dense<0.000000e+00> : vector<16xf32>
    %11 = vector.multi_reduction <add>, %10, %cst_3 [1] : vector<16x32xf32> to vector<16xf32>
    %12 = vector.shape_cast %11 : vector<16xf32> to vector<16x1xf32>
    %13 = math.log %12 : vector<16x1xf32>
    %14 = arith.addf %7, %13 : vector<16x1xf32>
    %15 = tpu.iota {dimensions = array<i32: 1>} : vector<16x32xi32>
    %16 = vector.broadcast %1 : vector<16x1xi32> to vector<16x32xi32>
    %17 = arith.cmpi eq, %15, %16 : vector<16x32xi32>
    %cst_4 = arith.constant 0.903124988 : f32
    %cst_5 = arith.constant 3.125000e-03 : f32
    %18 = vector.broadcast %cst_4 : f32 to vector<16x32xf32>
    %19 = vector.broadcast %cst_5 : f32 to vector<16x32xf32>
    %20 = arith.select %17, %18, %19 : vector<16x32xi1>, vector<16x32xf32>
    %21 = arith.mulf %20, %0 : vector<16x32xf32>
    %cst_6 = arith.constant dense<0.000000e+00> : vector<16xf32>
    %22 = vector.multi_reduction <add>, %21, %cst_6 [1] : vector<16x32xf32> to vector<16xf32>
    %23 = vector.shape_cast %22 : vector<16xf32> to vector<16x1xf32>
    %24 = arith.subf %14, %23 : vector<16x1xf32>
    %25 = arith.mulf %24, %5 : vector<16x1xf32>
    %26 = vector.shape_cast %25 : vector<16x1xf32> to vector<1x16x1xf32>
    %cst_7 = arith.constant dense<0.000000e+00> : vector<1xf32>
    %27 = vector.multi_reduction <add>, %26, %cst_7 [1, 2] : vector<1x16x1xf32> to vector<1xf32>
    %28 = vector.shape_cast %27 : vector<1xf32> to vector<1x1x1xf32>
    %29 = vector.extract %28[0, 0, 0] : f32 from vector<1x1x1xf32>
    %30 = vector.broadcast %29 : f32 to vector<1x8x128xf32>
    %c0_8 = arith.constant 0 : index
    %c0_9 = arith.constant 0 : index
    %c0_10 = arith.constant 0 : index
    %31 = vector.load %arg3[%c0_8, %c0_9, %c0_10] : memref<1x8x128xf32, #tpu.memory_space<vmem>>, vector<1x8x128xf32>
    tpu.vector_store %arg3[%c0_8, %c0_9, %c0_10], %30 {strides = array<i32>} : memref<1x8x128xf32, #tpu.memory_space<vmem>>, vector<1x8x128xf32>,
    return
  }
  func.func @transform_0(%arg0: i32) -> (i32, i32) {
    %c0_i32 = arith.constant 0 : i32
    %c0_i32_0 = arith.constant 0 : i32
    return %arg0, %c0_i32 : i32, i32
  }
  func.func @transform_1(%arg0: i32) -> (i32, i32) {
    %c0_i32 = arith.constant 0 : i32
    %c0_i32_0 = arith.constant 0 : i32
    return %arg0, %c0_i32 : i32, i32
  }
  func.func @transform_2(%arg0: i32) -> (i32, i32, i32) {
    %c0_i32 = arith.constant 0 : i32
    %c0_i32_0 = arith.constant 0 : i32
    %c0_i32_1 = arith.constant 0 : i32
    return %arg0, %c0_i32, %c0_i32_0 : i32, i32, i32
  }
}

</mosaic_0001>

<llo_original>
// kernel: tpu_custom_call.1
$region0: #{tpu_custom_call.1}
  #allocation0 [shape = 'u32[]', space=smem, size = 0x4, offset = 0x4, fixed_abs, tag = 'smem constant byte address 0x4 - core index']
  #allocation1 [shape = 'u32[144,128]{1,0:T(1,128)}', space=vmem, size = 0x12000, scoped, tag = 'internal scratch']
  %s0 = inlined_call_operand.vmem [shape: f32[16,32], index: 0, kind: input, shape index: {}]
  %s1 = inlined_call_operand.vmem [shape: s32[16,1], index: 1, kind: input, shape index: {}]
  %s2 = inlined_call_operand.hbm [shape: f32[1,8,128], index: 2, kind: output, shape index: {}]
  %s3 = sld [smem:[#allocation0]]
  $region18: #{tpu_custom_call.1} parent=0
    _
  %s5 = ssub.s32 1, %s3
  %s6 = scalar_select 0, %s5, %s3
  $region1: #{tpu_custom_call.1} parent=0
    #allocation2 [shape = 'u8[4096]{0}', space=vmem, size = 0x1000, scoped, tag = 'output window, operand 0, single buffered']
    #allocation3 [shape = 's32[1]{0}', space=sflag, size = 0x4, scoped, tag = 'scoped memory for tpu_custom_call.1']
    %7 = vsyncpa [#allocation3], 0
    // Predicated region
    $region2: #{tpu_custom_call.1} parent=1 // pred_check
      _
    $region3: #{tpu_custom_call.1} parent=1 // pred_check_branch
      %9 = sbr.rel (0) target = $region5
    $region4: #{tpu_custom_call.1} parent=1 // pred_region
      _
    $region5: #{tpu_custom_call.1} parent=1 // pred_fallthru
      _
    // Predicated region
    $region6: #{tpu_custom_call.1} parent=1 // pred_check
      _
    $region7: #{tpu_custom_call.1} parent=1 // pred_check_branch
      %11 = sbr.rel (0) target = $region9
    $region8: #{tpu_custom_call.1} parent=1 // pred_region
      _
    $region9: #{tpu_custom_call.1} parent=1 // pred_fallthru
      _
    %v12 = vld [vmem:[%s0] sm:$0xff]
    %v13 = vld [vmem:[%s0 + $0x8] sm:$0xff]
    %v14 = vld [vmem:[%s1] sm:$0xff]
    %v15 = vld [vmem:[%s1 + $0x8] sm:$0xff]
    %vm16 = vcmp.ge.s32.totalorder %v14, 0
    %vm17 = vcmp.ge.s32.totalorder %v15, 0
    %v18 = vsel %vm16, 1, 0
    %v19 = vsel %vm17, 1, 0
    %v20 = vcvt.s32.f32 %v18
    %v21 = vcvt.s32.f32 %v19
    %vm22 = vcmask 261120
    %v23 = vsel %vm22, %v12, -inf
    %24 = vmax.xlane.f32.xlu0 %v23
    %v25 = vpop.xlane.xlu0 %24
    %v26 = vsel %vm22, %v13, -inf
    %27 = vmax.xlane.f32.xlu0 %v26
    %v28 = vpop.xlane.xlu0 %27
    %v29 = vsub.f32 %v12, %v25
    %v30 = vsub.f32 %v13, %v28
    %v31 = vmul.f32 %v29, 1.442695
    %v32 = vpow.pop %v31
    %v33 = vmul.f32 %v30, 1.442695
    %v34 = vpow.pop %v33
    %v35 = vsel %vm22, %v32, 0.0
    %36 = vadd.xlane.f32.xlu0 %v35
    %v37 = vpop.xlane.xlu0 %36
    %v38 = vsel %vm22, %v34, 0.0
    %39 = vadd.xlane.f32.xlu0 %v38
    %v40 = vpop.xlane.xlu0 %39
    %v41 = vlog2.pop %v37
    %v42 = vmul.f32 %v41, 0.6931472
    %v43 = vlog2.pop %v40
    %v44 = vmul.f32 %v43, 0.6931472
    %v45 = vadd.f32 %v25, %v42
    %v46 = vadd.f32 %v28, %v44
    %v47 = vlaneseq
    %v48 = vand.u32 %v47, 127
    %49 = vset.pattern.permute.xlu0 0
    %50 = vperm.xlu0 %49, %v14
    %v51 = vpop.permute.xlu0 %50
    %52 = vset.pattern.permute.xlu0 0
    %53 = vperm.xlu0 %52, %v15
    %v54 = vpop.permute.xlu0 %53
    %vm55 = vcmp.eq.s32.totalorder %v48, %v51
    %vm56 = vcmp.eq.s32.totalorder %v48, %v54
    %v57 = vsel %vm55, 0.903125, 0.003125
    %v58 = vsel %vm56, 0.903125, 0.003125
    %v59 = vmul.f32 %v57, %v12
    %v60 = vmul.f32 %v58, %v13
    %v61 = vsel %vm22, %v59, 0.0
    %62 = vadd.xlane.f32.xlu0 %v61
    %v63 = vpop.xlane.xlu0 %62
    %v64 = vsel %vm22, %v60, 0.0
    %65 = vadd.xlane.f32.xlu0 %v64
    %v66 = vpop.xlane.xlu0 %65
    %v67 = vsub.f32 %v45, %v63
    %v68 = vsub.f32 %v46, %v66
    %v69 = vmul.f32 %v67, %v20
    %v70 = vmul.f32 %v68, %v21
    %vm71 = vcmask 7168
    %v72 = vsel %vm71, %v69, 0.0
    %v73 = vsel %vm71, %v70, 0.0
    %v74 = vadd.f32 %v72, %v73
    %75 = vadd.xlane.f32.xlu0 %v74
    %v76 = vpop.xlane.xlu0 %75
    %v77 = vrot.slane %v76, 4
    %v78 = vadd.f32 %v76, %v77
    %v79 = vrot.slane %v78, 2
    %v80 = vadd.f32 %v78, %v79
    %v81 = vrot.slane %v80, 1
    %v82 = vadd.f32 %v80, %v81
    %s83 = vtos %v82
    %v84 = vstv %s83
    %85 = vst [vmem:[#allocation2] sm:$0xff] %v84
    // Predicated region
    $region10: #{tpu_custom_call.1} parent=1 // pred_check
      _
    $region11: #{tpu_custom_call.1} parent=1 // pred_check_branch
      %87 = sbr.rel (0) target = $region13
    $region12: #{tpu_custom_call.1} parent=1 // pred_region
      %s89 = ssub.s32 128, 128
      %90 = vsyncadd [#allocation3], %s89
      %s92 = sshll.u32 [#allocation2], 4
      %s93 = int_to_ptr.vmem [resolvable:$true] %s92
      %95 = dma.vmem_to_hbm [thread:$0]  %s93, 128, %s2, [#allocation3]
    $region13: #{tpu_custom_call.1} parent=1 // pred_fallthru
      _
    // Predicated region
    $region14: #{tpu_custom_call.1} parent=1 // pred_check
      _
    $region15: #{tpu_custom_call.1} parent=1 // pred_check_branch
      %97 = sbr.rel (0) target = $region17
    $region16: #{tpu_custom_call.1} parent=1 // pred_region
      %98 = dma.done [#allocation3], 128
    $region17: #{tpu_custom_call.1} parent=1 // pred_fallthru
      _
    %99 = vsyncpa [#allocation3], 1

</llo_original>
